<compile_context>
chip_gen: v7x
topology: tpu7x:2x2x1
jax: 0.10.0
libtpu: 0.0.40
codegen_flags: <defaults>
</compile_context>

<pallas_src>
from functools import partial

import jax
import jax.numpy as jnp
from jax.experimental import pallas as pl
from jax.experimental.pallas import tpu as pltpu


def _bottleneck_kernel(x_ref, m_ref, w0_ref, w1_ref, w2_ref, alpha_ref,
                       out_ref, col_ref, *, W):
    Bb, Cin_p, HW = x_ref.shape
    Cmid_p = w0_ref.shape[0]
    Cout = out_ref.shape[1]
    L = Bb * HW
    K = col_ref.shape[0]
    cdt = col_ref.dtype                       # bf16 (MXU-native operand dtype)

    a0 = alpha_ref[0]
    a1 = alpha_ref[1]
    a2 = alpha_ref[2]

    # Bias block of the im2col slab (rows 0..7): row 0 = ones, rows 1..7 = 0.
    # Written every grid step so it is valid on every TensorCore when the
    # batch axis is sharded across cores.
    row_id = jax.lax.broadcasted_iota(jnp.int32, (8, L), 0)
    col_ref[0:8, :] = jnp.where(row_id == 0, 1.0, 0.0).astype(cdt)

    # Defensive zero of trailing slab rows conv0 does not fill (only traced
    # when Cmid_p > Cin_p, which cannot happen for this module).
    top0 = 8 + 9 * Cin_p
    if K > top0:
        col_ref[top0:K, :] = jnp.zeros((K - top0, L), cdt)

    offs = [(ky - 1) * W + (kx - 1) for ky in range(3) for kx in range(3)]

    def build_taps(get_img, c_p):
        # Write the 9 shifted + edge-masked taps of every image in the block
        # into the im2col slab: rows [8 + t*c_p, 8 + (t+1)*c_p), lanes
        # [i*HW, (i+1)*HW).  Lane rolls go to the XLU; masks reproduce the
        # 'same' zero padding (and suppress any cross-image roll leakage).
        for i in range(Bb):
            img = get_img(i)                              # (c_p, HW) f32
            for t, off in enumerate(offs):
                if off == 0:
                    tap = img                             # centre tap
                else:
                    tap = pltpu.roll(img, (-off) % HW, 1) * m_ref[t:t + 1, :]
                col_ref[8 + t * c_p:8 + (t + 1) * c_p,
                        i * HW:(i + 1) * HW] = tap.astype(cdt)

    def prelu(v, a):
        return jnp.where(v > 0, v, a * v)

    # ---- conv0 (3x3,pad1) + folded bn0 + bias + PReLU0: one MXU matmul ----
    build_taps(lambda i: x_ref[i], Cin_p)
    h = jnp.dot(w0_ref[...], col_ref[...], preferred_element_type=jnp.float32)
    h = prelu(h, a0)                                      # (Cmid_p, L) f32

    # ---- conv1 (3x3,pad1) + folded bn1 + bias + PReLU1 ----
    build_taps(lambda i: h[:, i * HW:(i + 1) * HW], Cmid_p)
    h = jnp.dot(w1_ref[...], col_ref[...], preferred_element_type=jnp.float32)
    h = prelu(h, a1)                                      # (Cmid_p, L) f32

    # ---- block2: 1x1 conv + folded bn + bias + PReLU (Dropout == identity) --
    col_ref[8:8 + Cmid_p, :] = h.astype(cdt)              # reuse ones row
    h = jnp.dot(w2_ref[...], col_ref[0:8 + Cmid_p, :],
                preferred_element_type=jnp.float32)
    h = prelu(h, a2)                                      # (Cout_p, L) f32

    # Emit the real (unpadded) Cout directly, lane-dense per image.
    for i in range(Bb):
        out_ref[i] = h[:Cout, i * HW:(i + 1) * HW]


def _round_up(n, m=8):
    return ((n + m - 1) // m) * m


def _pack_conv3x3(w, b, cin_p, cout_p, K):
    """(Cout,Cin,3,3) conv + bias -> (cout_p, K) bf16 im2col weight slab.

    Column 0 pairs with the ones row of the im2col slab (bias); column
    8 + t*cin_p + c holds w[:, c, ky, kx] with t = ky*3 + kx.
    """
    cout, cin = w.shape[0], w.shape[1]
    taps = jnp.transpose(w, (0, 2, 3, 1)).reshape(cout, 9, cin)
    taps = jnp.pad(taps, ((0, 0), (0, 0), (0, cin_p - cin)))
    taps = taps.reshape(cout, 9 * cin_p)
    bias_blk = jnp.pad(b[:, None], ((0, 0), (0, 7)))       # col 0 = bias
    slab = jnp.concatenate([bias_blk, taps], axis=1)
    slab = jnp.pad(slab, ((0, cout_p - cout), (0, K - slab.shape[1])))
    return slab.astype(jnp.bfloat16)


def _pack_conv1x1(w, b, cin_p, cout_p):
    cout, cin = w.shape[0], w.shape[1]
    bias_blk = jnp.pad(b[:, None], ((0, 0), (0, 7)))       # col 0 = bias
    core = jnp.pad(w[:, :, 0, 0], ((0, 0), (0, cin_p - cin)))
    slab = jnp.concatenate([bias_blk, core], axis=1)       # (cout, 8+cin_p)
    return jnp.pad(slab, ((0, cout_p - cout), (0, 0))).astype(jnp.bfloat16)


def _make_tap_masks(H, W):
    """(9, H*W) validity masks reproducing 'same' 3x3 zero padding."""
    pos = jnp.arange(H * W, dtype=jnp.int32)
    py, px = pos // W, pos % W
    rows = []
    for ky in range(3):
        for kx in range(3):
            dy, dx = ky - 1, kx - 1
            rows.append((py + dy >= 0) & (py + dy < H)
                        & (px + dx >= 0) & (px + dx < W))
    return jnp.stack(rows).astype(jnp.float32)


def bottleneck_upsampling(x, params):
    """x: (B, Cin, H, W) float32 NCHW -> (B, Cout, H, W) float32."""
    B, Cin, H, W = x.shape
    Cmid = params["w0"].shape[0]
    Cout = params["w2"].shape[0]
    HW = H * W

    Cin_p, Cmid_p, Cout_p = _round_up(Cin), _round_up(Cmid), _round_up(Cout)
    K = 8 + 9 * max(Cin_p, Cmid_p)      # im2col contraction, multiple of 8

    # Pack Bb images onto the lane axis per grid step, but keep >= 2 grid
    # steps so "parallel" batch sharding can use both v7x TensorCores.
    Bb = B // 2 if (B >= 2 and B % 2 == 0) else 1
    grid = (B // Bb,)

    # Lane-dense activations: (B, Cin_p, HW); HW is a multiple of 128.
    x_p = jnp.pad(x.reshape(B, Cin, HW), ((0, 0), (0, Cin_p - Cin), (0, 0)))

    w0s = _pack_conv3x3(params["w0"], params["b0"], Cin_p, Cmid_p, K)
    w1s = _pack_conv3x3(params["w1"], params["b1"], Cmid_p, Cmid_p, K)
    w2s = _pack_conv1x1(params["w2"], params["b2"], Cmid_p, Cout_p)
    masks = _make_tap_masks(H, W)

    kernel = partial(_bottleneck_kernel, W=W)

    flops = 2 * B * HW * (2 * Cmid_p * K + Cout_p * (8 + Cmid_p))
    bytes_accessed = (4 * x_p.size + 4 * B * Cout * HW + 4 * masks.size
                      + 2 * (w0s.size + w1s.size + w2s.size))

    out = pl.pallas_call(
        kernel,
        out_shape=jax.ShapeDtypeStruct((B, Cout, HW), jnp.float32),
        grid=grid,
        in_specs=[
            pl.BlockSpec((Bb, Cin_p, HW), lambda b: (b, 0, 0)),
            pl.BlockSpec((9, HW), lambda b: (0, 0)),
            pl.BlockSpec((Cmid_p, K), lambda b: (0, 0)),
            pl.BlockSpec((Cmid_p, K), lambda b: (0, 0)),
            pl.BlockSpec((Cout_p, 8 + Cmid_p), lambda b: (0, 0)),
            pl.BlockSpec(memory_space=pltpu.MemorySpace.SMEM),  # PReLU alphas
        ],
        out_specs=pl.BlockSpec((Bb, Cout, HW), lambda b: (b, 0, 0)),
        scratch_shapes=[pltpu.VMEM((K, Bb * HW), jnp.bfloat16)],  # im2col slab
        compiler_params=pltpu.CompilerParams(
            dimension_semantics=("parallel",),
            vmem_limit_bytes=32 * 1024 * 1024),
        cost_estimate=pl.CostEstimate(
            flops=flops, transcendentals=0, bytes_accessed=bytes_accessed),
    )(x_p, masks, w0s, w1s, w2s, params["alphas"])

    # Free reshape only (kernel already emits the real Cout, batch-major).
    return out.reshape(B, Cout, H, W)


def _fold_bn(w, b, gamma, beta, mean, var, eps=1e-5):
    """Fold inference-mode BatchNorm into the preceding conv."""
    scale = gamma / jnp.sqrt(var + eps)
    return w * scale[:, None, None, None], (b - mean) * scale + beta


def _make_params(key, in_dim, projection_factor, out_dim):
    mid = int(in_dim / projection_factor)
    ks = jax.random.split(key, 6)

    def uconv(k, shape):
        fan_in = shape[1] * shape[2] * shape[3]
        bound = 1.0 / jnp.sqrt(fan_in)
        return jax.random.uniform(k, shape, jnp.float32, -bound, bound)

    def ubias(k, n, fan_in):
        bound = 1.0 / jnp.sqrt(fan_in)
        return jax.random.uniform(k, (n,), jnp.float32, -bound, bound)

    w0 = uconv(ks[0], (mid, in_dim, 3, 3))
    b0 = ubias(ks[1], mid, in_dim * 9)
    w1 = uconv(ks[2], (mid, mid, 3, 3))
    b1 = ubias(ks[3], mid, mid * 9)
    w2 = uconv(ks[4], (out_dim, mid, 1, 1))
    b2 = ubias(ks[5], out_dim, mid)

    # Fresh BatchNorm (eval): gamma=1, beta=0, running_mean=0, running_var=1.
    def bn_id(n):
        return (jnp.ones(n), jnp.zeros(n), jnp.zeros(n), jnp.ones(n))

    w0f, b0f = _fold_bn(w0, b0, *bn_id(mid))
    w1f, b1f = _fold_bn(w1, b1, *bn_id(mid))
    w2f, b2f = _fold_bn(w2, b2, *bn_id(out_dim))

    return {
        "w0": w0f, "b0": b0f,
        "w1": w1f, "b1": b1f,
        "w2": w2f, "b2": b2f,
        "alphas": jnp.array([0.25, 0.25, 0.25], jnp.float32),  # PReLU init
    }


def _ref_forward(x, p):
    """Pure-JAX f32 reference (post BN-folding) for correctness checking."""
    def conv(x, w, b, pad):
        y = jax.lax.conv_general_dilated(
            x, w, (1, 1), [(pad, pad), (pad, pad)],
            dimension_numbers=("NCHW", "OIHW", "NCHW"))
        return y + b[None, :, None, None]

    def prelu(x, a):
        return jnp.where(x > 0, x, a * x)

    h = prelu(conv(x, p["w0"], p["b0"], 1), p["alphas"][0])
    h = prelu(conv(h, p["w1"], p["b1"], 1), p["alphas"][1])
    h = prelu(conv(h, p["w2"], p["b2"], 0), p["alphas"][2])
    return h  # dropout == identity at inference


if __name__ == "__main__":
    B, in_dim, H, W = 2, 4, 16, 16
    projection_factor, out_dim = 2, 4

    key = jax.random.PRNGKey(0)
    kx, kp = jax.random.split(key)
    x = jax.random.normal(kx, (B, in_dim, H, W), jnp.float32)
    params = _make_params(kp, in_dim, projection_factor, out_dim)

    y = bottleneck_upsampling(x, params)
    y = jax.block_until_ready(y)

    y_ref = _ref_forward(x, params)
    assert y.shape == (B, out_dim, H, W)
    # Tolerance loosened vs. the f32 reference because matmul operands are
    # bf16 (f32 accumulation on the MXU).
    err = float(jnp.max(jnp.abs(y - y_ref)))
    assert jnp.allclose(y, y_ref, atol=2e-2, rtol=2e-2), err

    print("KERNEL_OK")
</pallas_src>

<mosaic_0001>
module attributes {stable_mosaic.version = 11 : i64} {
  func.func @_bottleneck_kernel(%arg0: i32, %arg1: memref<1x8x256xf32, #tpu.memory_space<vmem>>, %arg2: memref<9x256xf32, #tpu.memory_space<vmem>>, %arg3: memref<8x80xbf16, #tpu.memory_space<vmem>>, %arg4: memref<8x80xbf16, #tpu.memory_space<vmem>>, %arg5: memref<8x16xbf16, #tpu.memory_space<vmem>>, %arg6: memref<3xf32, #tpu.memory_space<smem>>, %arg7: memref<1x4x256xf32, #tpu.memory_space<vmem>>, %arg8: memref<80x256xbf16, #tpu.memory_space<vmem>>) attributes {dimension_semantics = [#tpu.dimension_semantics<parallel>], iteration_bounds = array<i64: 2>, scalar_prefetch = 0 : i64, scratch_operands = 1 : i64, tpu.core_type = #tpu.core_type<tc>, window_params = [{transform_indices = @transform_0, window_bounds = array<i64: 1, 8, 256>}, {pipeline_mode = #tpu.pipeline_mode<synchronous>, transform_indices = @transform_1, window_bounds = array<i64: 9, 256>}, {pipeline_mode = #tpu.pipeline_mode<synchronous>, transform_indices = @transform_2, window_bounds = array<i64: 8, 80>}, {pipeline_mode = #tpu.pipeline_mode<synchronous>, transform_indices = @transform_3, window_bounds = array<i64: 8, 80>}, {pipeline_mode = #tpu.pipeline_mode<synchronous>, transform_indices = @transform_4, window_bounds = array<i64: 8, 16>}, {transform_indices = @transform_5, window_bounds = array<i64: 3>}, {transform_indices = @transform_6, window_bounds = array<i64: 1, 4, 256>}]} {
    %c0 = arith.constant 0 : index
    %0 = memref.load %arg6[%c0] : memref<3xf32, #tpu.memory_space<smem>>
    %c1 = arith.constant 1 : index
    %1 = memref.load %arg6[%c1] : memref<3xf32, #tpu.memory_space<smem>>
    %c2 = arith.constant 2 : index
    %2 = memref.load %arg6[%c2] : memref<3xf32, #tpu.memory_space<smem>>
    %3 = tpu.iota {dimensions = array<i32: 0>} : vector<8x256xi32>
    %c0_i32 = arith.constant 0 : i32
    %4 = vector.broadcast %c0_i32 : i32 to vector<8x256xi32>
    %5 = arith.cmpi eq, %3, %4 : vector<8x256xi32>
    %cst = arith.constant 1.000000e+00 : f32
    %cst_0 = arith.constant 0.000000e+00 : f32
    %6 = vector.broadcast %cst : f32 to vector<8x256xf32>
    %7 = vector.broadcast %cst_0 : f32 to vector<8x256xf32>
    %8 = arith.select %5, %6, %7 : vector<8x256xi1>, vector<8x256xf32>
    %9 = arith.truncf %8 : vector<8x256xf32> to vector<8x256xbf16>
    %c0_1 = arith.constant 0 : index
    %c0_2 = arith.constant 0 : index
    %10 = vector.load %arg8[%c0_1, %c0_2] : memref<80x256xbf16, #tpu.memory_space<vmem>>, vector<8x256xbf16>
    tpu.vector_store %arg8[%c0_1, %c0_2], %9 {strides = array<i32>} : memref<80x256xbf16, #tpu.memory_space<vmem>>, vector<8x256xbf16>,
    %c0_3 = arith.constant 0 : index
    %c0_4 = arith.constant 0 : index
    %c0_5 = arith.constant 0 : index
    %11 = vector.load %arg1[%c0_3, %c0_4, %c0_5] : memref<1x8x256xf32, #tpu.memory_space<vmem>>, vector<1x8x256xf32>
    %12 = vector.shape_cast %11 : vector<1x8x256xf32> to vector<8x256xf32>
    %c17_i32 = arith.constant 17 : i32
    %13 = tpu.dynamic_rotate %12 by %c17_i32 dim 1 : vector<8x256xf32>, i32 -> vector<8x256xf32>
    %c0_6 = arith.constant 0 : index
    %c0_7 = arith.constant 0 : index
    %14 = vector.load %arg2[%c0_6, %c0_7] : memref<9x256xf32, #tpu.memory_space<vmem>>, vector<1x256xf32>
    %15 = vector.broadcast %14 : vector<1x256xf32> to vector<8x256xf32>
    %16 = arith.mulf %13, %15 : vector<8x256xf32>
    %17 = arith.truncf %16 : vector<8x256xf32> to vector<8x256xbf16>
    %c8 = arith.constant 8 : index
    %c0_8 = arith.constant 0 : index
    %18 = vector.load %arg8[%c8, %c0_8] : memref<80x256xbf16, #tpu.memory_space<vmem>>, vector<8x256xbf16>
    tpu.vector_store %arg8[%c8, %c0_8], %17 {strides = array<i32>} : memref<80x256xbf16, #tpu.memory_space<vmem>>, vector<8x256xbf16>,
    %c16_i32 = arith.constant 16 : i32
    %19 = tpu.dynamic_rotate %12 by %c16_i32 dim 1 : vector<8x256xf32>, i32 -> vector<8x256xf32>
    %c1_9 = arith.constant 1 : index
    %c0_10 = arith.constant 0 : index
    %20 = vector.load %arg2[%c1_9, %c0_10] : memref<9x256xf32, #tpu.memory_space<vmem>>, vector<1x256xf32>
    %21 = vector.broadcast %20 : vector<1x256xf32> to vector<8x256xf32>
    %22 = arith.mulf %19, %21 : vector<8x256xf32>
    %23 = arith.truncf %22 : vector<8x256xf32> to vector<8x256xbf16>
    %c16 = arith.constant 16 : index
    %c0_11 = arith.constant 0 : index
    %24 = vector.load %arg8[%c16, %c0_11] : memref<80x256xbf16, #tpu.memory_space<vmem>>, vector<8x256xbf16>
    tpu.vector_store %arg8[%c16, %c0_11], %23 {strides = array<i32>} : memref<80x256xbf16, #tpu.memory_space<vmem>>, vector<8x256xbf16>,
    %c15_i32 = arith.constant 15 : i32
    %25 = tpu.dynamic_rotate %12 by %c15_i32 dim 1 : vector<8x256xf32>, i32 -> vector<8x256xf32>
    %c2_12 = arith.constant 2 : index
    %c0_13 = arith.constant 0 : index
    %26 = vector.load %arg2[%c2_12, %c0_13] : memref<9x256xf32, #tpu.memory_space<vmem>>, vector<1x256xf32>
    %27 = vector.broadcast %26 : vector<1x256xf32> to vector<8x256xf32>
    %28 = arith.mulf %25, %27 : vector<8x256xf32>
    %29 = arith.truncf %28 : vector<8x256xf32> to vector<8x256xbf16>
    %c24 = arith.constant 24 : index
    %c0_14 = arith.constant 0 : index
    %30 = vector.load %arg8[%c24, %c0_14] : memref<80x256xbf16, #tpu.memory_space<vmem>>, vector<8x256xbf16>
    tpu.vector_store %arg8[%c24, %c0_14], %29 {strides = array<i32>} : memref<80x256xbf16, #tpu.memory_space<vmem>>, vector<8x256xbf16>,
    %c1_i32 = arith.constant 1 : i32
    %31 = tpu.dynamic_rotate %12 by %c1_i32 dim 1 : vector<8x256xf32>, i32 -> vector<8x256xf32>
    %c3 = arith.constant 3 : index
    %c0_15 = arith.constant 0 : index
    %32 = vector.load %arg2[%c3, %c0_15] : memref<9x256xf32, #tpu.memory_space<vmem>>, vector<1x256xf32>
    %33 = vector.broadcast %32 : vector<1x256xf32> to vector<8x256xf32>
    %34 = arith.mulf %31, %33 : vector<8x256xf32>
    %35 = arith.truncf %34 : vector<8x256xf32> to vector<8x256xbf16>
    %c32 = arith.constant 32 : index
    %c0_16 = arith.constant 0 : index
    %36 = vector.load %arg8[%c32, %c0_16] : memref<80x256xbf16, #tpu.memory_space<vmem>>, vector<8x256xbf16>
    tpu.vector_store %arg8[%c32, %c0_16], %35 {strides = array<i32>} : memref<80x256xbf16, #tpu.memory_space<vmem>>, vector<8x256xbf16>,
    %37 = arith.truncf %12 : vector<8x256xf32> to vector<8x256xbf16>
    %c40 = arith.constant 40 : index
    %c0_17 = arith.constant 0 : index
    %38 = vector.load %arg8[%c40, %c0_17] : memref<80x256xbf16, #tpu.memory_space<vmem>>, vector<8x256xbf16>
    tpu.vector_store %arg8[%c40, %c0_17], %37 {strides = array<i32>} : memref<80x256xbf16, #tpu.memory_space<vmem>>, vector<8x256xbf16>,
    %c255_i32 = arith.constant 255 : i32
    %39 = tpu.dynamic_rotate %12 by %c255_i32 dim 1 : vector<8x256xf32>, i32 -> vector<8x256xf32>
    %c5 = arith.constant 5 : index
    %c0_18 = arith.constant 0 : index
    %40 = vector.load %arg2[%c5, %c0_18] : memref<9x256xf32, #tpu.memory_space<vmem>>, vector<1x256xf32>
    %41 = vector.broadcast %40 : vector<1x256xf32> to vector<8x256xf32>
    %42 = arith.mulf %39, %41 : vector<8x256xf32>
    %43 = arith.truncf %42 : vector<8x256xf32> to vector<8x256xbf16>
    %c48 = arith.constant 48 : index
    %c0_19 = arith.constant 0 : index
    %44 = vector.load %arg8[%c48, %c0_19] : memref<80x256xbf16, #tpu.memory_space<vmem>>, vector<8x256xbf16>
    tpu.vector_store %arg8[%c48, %c0_19], %43 {strides = array<i32>} : memref<80x256xbf16, #tpu.memory_space<vmem>>, vector<8x256xbf16>,
    %c241_i32 = arith.constant 241 : i32
    %45 = tpu.dynamic_rotate %12 by %c241_i32 dim 1 : vector<8x256xf32>, i32 -> vector<8x256xf32>
    %c6 = arith.constant 6 : index
    %c0_20 = arith.constant 0 : index
    %46 = vector.load %arg2[%c6, %c0_20] : memref<9x256xf32, #tpu.memory_space<vmem>>, vector<1x256xf32>
    %47 = vector.broadcast %46 : vector<1x256xf32> to vector<8x256xf32>
    %48 = arith.mulf %45, %47 : vector<8x256xf32>
    %49 = arith.truncf %48 : vector<8x256xf32> to vector<8x256xbf16>
    %c56 = arith.constant 56 : index
    %c0_21 = arith.constant 0 : index
    %50 = vector.load %arg8[%c56, %c0_21] : memref<80x256xbf16, #tpu.memory_space<vmem>>, vector<8x256xbf16>
    tpu.vector_store %arg8[%c56, %c0_21], %49 {strides = array<i32>} : memref<80x256xbf16, #tpu.memory_space<vmem>>, vector<8x256xbf16>,
    %c240_i32 = arith.constant 240 : i32
    %51 = tpu.dynamic_rotate %12 by %c240_i32 dim 1 : vector<8x256xf32>, i32 -> vector<8x256xf32>
    %c7 = arith.constant 7 : index
    %c0_22 = arith.constant 0 : index
    %52 = vector.load %arg2[%c7, %c0_22] : memref<9x256xf32, #tpu.memory_space<vmem>>, vector<1x256xf32>
    %53 = vector.broadcast %52 : vector<1x256xf32> to vector<8x256xf32>
    %54 = arith.mulf %51, %53 : vector<8x256xf32>
    %55 = arith.truncf %54 : vector<8x256xf32> to vector<8x256xbf16>
    %c64 = arith.constant 64 : index
    %c0_23 = arith.constant 0 : index
    %56 = vector.load %arg8[%c64, %c0_23] : memref<80x256xbf16, #tpu.memory_space<vmem>>, vector<8x256xbf16>
    tpu.vector_store %arg8[%c64, %c0_23], %55 {strides = array<i32>} : memref<80x256xbf16, #tpu.memory_space<vmem>>, vector<8x256xbf16>,
    %c239_i32 = arith.constant 239 : i32
    %57 = tpu.dynamic_rotate %12 by %c239_i32 dim 1 : vector<8x256xf32>, i32 -> vector<8x256xf32>
    %c8_24 = arith.constant 8 : index
    %c0_25 = arith.constant 0 : index
    %58 = vector.load %arg2[%c8_24, %c0_25] : memref<9x256xf32, #tpu.memory_space<vmem>>, vector<1x256xf32>
    %59 = vector.broadcast %58 : vector<1x256xf32> to vector<8x256xf32>
    %60 = arith.mulf %57, %59 : vector<8x256xf32>
    %61 = arith.truncf %60 : vector<8x256xf32> to vector<8x256xbf16>
    %c72 = arith.constant 72 : index
    %c0_26 = arith.constant 0 : index
    %62 = vector.load %arg8[%c72, %c0_26] : memref<80x256xbf16, #tpu.memory_space<vmem>>, vector<8x256xbf16>
    tpu.vector_store %arg8[%c72, %c0_26], %61 {strides = array<i32>} : memref<80x256xbf16, #tpu.memory_space<vmem>>, vector<8x256xbf16>,
    %c0_27 = arith.constant 0 : index
    %c0_28 = arith.constant 0 : index
    %63 = vector.load %arg3[%c0_27, %c0_28] : memref<8x80xbf16, #tpu.memory_space<vmem>>, vector<8x80xbf16>
    %c0_29 = arith.constant 0 : index
    %c0_30 = arith.constant 0 : index
    %64 = vector.load %arg8[%c0_29, %c0_30] : memref<80x256xbf16, #tpu.memory_space<vmem>>, vector<80x256xbf16>
    %cst_31 = arith.constant dense<0.000000e+00> : vector<8x256xf32>
    %65 = tpu.matmul %63, %64, %cst_31 {dimension_numbers = #tpu.dot_dimension_numbers<[1], [0], [0], [1], [0, 0, 1, 1], [], []>} : vector<8x80xbf16>, vector<80x256xbf16>, vector<8x256xf32> -> vector<8x256xf32>
    %cst_32 = arith.constant 0.000000e+00 : f32
    %66 = vector.broadcast %cst_32 : f32 to vector<8x256xf32>
    %67 = arith.cmpf ogt, %65, %66 : vector<8x256xf32>
    %68 = vector.broadcast %0 : f32 to vector<8x256xf32>
    %69 = arith.mulf %68, %65 : vector<8x256xf32>
    %70 = arith.select %67, %65, %69 : vector<8x256xi1>, vector<8x256xf32>
    %c17_i32_33 = arith.constant 17 : i32
    %71 = tpu.dynamic_rotate %70 by %c17_i32_33 dim 1 : vector<8x256xf32>, i32 -> vector<8x256xf32>
    %c0_34 = arith.constant 0 : index
    %c0_35 = arith.constant 0 : index
    %72 = vector.load %arg2[%c0_34, %c0_35] : memref<9x256xf32, #tpu.memory_space<vmem>>, vector<1x256xf32>
    %73 = vector.broadcast %72 : vector<1x256xf32> to vector<8x256xf32>
    %74 = arith.mulf %71, %73 : vector<8x256xf32>
    %75 = arith.truncf %74 : vector<8x256xf32> to vector<8x256xbf16>
    %c8_36 = arith.constant 8 : index
    %c0_37 = arith.constant 0 : index
    %76 = vector.load %arg8[%c8_36, %c0_37] : memref<80x256xbf16, #tpu.memory_space<vmem>>, vector<8x256xbf16>
    tpu.vector_store %arg8[%c8_36, %c0_37], %75 {strides = array<i32>} : memref<80x256xbf16, #tpu.memory_space<vmem>>, vector<8x256xbf16>,
    %c16_i32_38 = arith.constant 16 : i32
    %77 = tpu.dynamic_rotate %70 by %c16_i32_38 dim 1 : vector<8x256xf32>, i32 -> vector<8x256xf32>
    %c1_39 = arith.constant 1 : index
    %c0_40 = arith.constant 0 : index
    %78 = vector.load %arg2[%c1_39, %c0_40] : memref<9x256xf32, #tpu.memory_space<vmem>>, vector<1x256xf32>
    %79 = vector.broadcast %78 : vector<1x256xf32> to vector<8x256xf32>
    %80 = arith.mulf %77, %79 : vector<8x256xf32>
    %81 = arith.truncf %80 : vector<8x256xf32> to vector<8x256xbf16>
    %c16_41 = arith.constant 16 : index
    %c0_42 = arith.constant 0 : index
    %82 = vector.load %arg8[%c16_41, %c0_42] : memref<80x256xbf16, #tpu.memory_space<vmem>>, vector<8x256xbf16>
    tpu.vector_store %arg8[%c16_41, %c0_42], %81 {strides = array<i32>} : memref<80x256xbf16, #tpu.memory_space<vmem>>, vector<8x256xbf16>,
    %c15_i32_43 = arith.constant 15 : i32
    %83 = tpu.dynamic_rotate %70 by %c15_i32_43 dim 1 : vector<8x256xf32>, i32 -> vector<8x256xf32>
    %c2_44 = arith.constant 2 : index
    %c0_45 = arith.constant 0 : index
    %84 = vector.load %arg2[%c2_44, %c0_45] : memref<9x256xf32, #tpu.memory_space<vmem>>, vector<1x256xf32>
    %85 = vector.broadcast %84 : vector<1x256xf32> to vector<8x256xf32>
    %86 = arith.mulf %83, %85 : vector<8x256xf32>
    %87 = arith.truncf %86 : vector<8x256xf32> to vector<8x256xbf16>
    %c24_46 = arith.constant 24 : index
    %c0_47 = arith.constant 0 : index
    %88 = vector.load %arg8[%c24_46, %c0_47] : memref<80x256xbf16, #tpu.memory_space<vmem>>, vector<8x256xbf16>
    tpu.vector_store %arg8[%c24_46, %c0_47], %87 {strides = array<i32>} : memref<80x256xbf16, #tpu.memory_space<vmem>>, vector<8x256xbf16>,
    %c1_i32_48 = arith.constant 1 : i32
    %89 = tpu.dynamic_rotate %70 by %c1_i32_48 dim 1 : vector<8x256xf32>, i32 -> vector<8x256xf32>
    %c3_49 = arith.constant 3 : index
    %c0_50 = arith.constant 0 : index
    %90 = vector.load %arg2[%c3_49, %c0_50] : memref<9x256xf32, #tpu.memory_space<vmem>>, vector<1x256xf32>
    %91 = vector.broadcast %90 : vector<1x256xf32> to vector<8x256xf32>
    %92 = arith.mulf %89, %91 : vector<8x256xf32>
    %93 = arith.truncf %92 : vector<8x256xf32> to vector<8x256xbf16>
    %c32_51 = arith.constant 32 : index
    %c0_52 = arith.constant 0 : index
    %94 = vector.load %arg8[%c32_51, %c0_52] : memref<80x256xbf16, #tpu.memory_space<vmem>>, vector<8x256xbf16>
    tpu.vector_store %arg8[%c32_51, %c0_52], %93 {strides = array<i32>} : memref<80x256xbf16, #tpu.memory_space<vmem>>, vector<8x256xbf16>,
    %95 = arith.truncf %70 : vector<8x256xf32> to vector<8x256xbf16>
    %c40_53 = arith.constant 40 : index
    %c0_54 = arith.constant 0 : index
    %96 = vector.load %arg8[%c40_53, %c0_54] : memref<80x256xbf16, #tpu.memory_space<vmem>>, vector<8x256xbf16>
    tpu.vector_store %arg8[%c40_53, %c0_54], %95 {strides = array<i32>} : memref<80x256xbf16, #tpu.memory_space<vmem>>, vector<8x256xbf16>,
    %c255_i32_55 = arith.constant 255 : i32
    %97 = tpu.dynamic_rotate %70 by %c255_i32_55 dim 1 : vector<8x256xf32>, i32 -> vector<8x256xf32>
    %c5_56 = arith.constant 5 : index
    %c0_57 = arith.constant 0 : index
    %98 = vector.load %arg2[%c5_56, %c0_57] : memref<9x256xf32, #tpu.memory_space<vmem>>, vector<1x256xf32>
    %99 = vector.broadcast %98 : vector<1x256xf32> to vector<8x256xf32>
    %100 = arith.mulf %97, %99 : vector<8x256xf32>
    %101 = arith.truncf %100 : vector<8x256xf32> to vector<8x256xbf16>
    %c48_58 = arith.constant 48 : index
    %c0_59 = arith.constant 0 : index
    %102 = vector.load %arg8[%c48_58, %c0_59] : memref<80x256xbf16, #tpu.memory_space<vmem>>, vector<8x256xbf16>
    tpu.vector_store %arg8[%c48_58, %c0_59], %101 {strides = array<i32>} : memref<80x256xbf16, #tpu.memory_space<vmem>>, vector<8x256xbf16>,
    %c241_i32_60 = arith.constant 241 : i32
    %103 = tpu.dynamic_rotate %70 by %c241_i32_60 dim 1 : vector<8x256xf32>, i32 -> vector<8x256xf32>
    %c6_61 = arith.constant 6 : index
    %c0_62 = arith.constant 0 : index
    %104 = vector.load %arg2[%c6_61, %c0_62] : memref<9x256xf32, #tpu.memory_space<vmem>>, vector<1x256xf32>
    %105 = vector.broadcast %104 : vector<1x256xf32> to vector<8x256xf32>
    %106 = arith.mulf %103, %105 : vector<8x256xf32>
    %107 = arith.truncf %106 : vector<8x256xf32> to vector<8x256xbf16>
    %c56_63 = arith.constant 56 : index
    %c0_64 = arith.constant 0 : index
    %108 = vector.load %arg8[%c56_63, %c0_64] : memref<80x256xbf16, #tpu.memory_space<vmem>>, vector<8x256xbf16>
    tpu.vector_store %arg8[%c56_63, %c0_64], %107 {strides = array<i32>} : memref<80x256xbf16, #tpu.memory_space<vmem>>, vector<8x256xbf16>,
    %c240_i32_65 = arith.constant 240 : i32
    %109 = tpu.dynamic_rotate %70 by %c240_i32_65 dim 1 : vector<8x256xf32>, i32 -> vector<8x256xf32>
    %c7_66 = arith.constant 7 : index
    %c0_67 = arith.constant 0 : index
    %110 = vector.load %arg2[%c7_66, %c0_67] : memref<9x256xf32, #tpu.memory_space<vmem>>, vector<1x256xf32>
    %111 = vector.broadcast %110 : vector<1x256xf32> to vector<8x256xf32>
    %112 = arith.mulf %109, %111 : vector<8x256xf32>
    %113 = arith.truncf %112 : vector<8x256xf32> to vector<8x256xbf16>
    %c64_68 = arith.constant 64 : index
    %c0_69 = arith.constant 0 : index
    %114 = vector.load %arg8[%c64_68, %c0_69] : memref<80x256xbf16, #tpu.memory_space<vmem>>, vector<8x256xbf16>
    tpu.vector_store %arg8[%c64_68, %c0_69], %113 {strides = array<i32>} : memref<80x256xbf16, #tpu.memory_space<vmem>>, vector<8x256xbf16>,
    %c239_i32_70 = arith.constant 239 : i32
    %115 = tpu.dynamic_rotate %70 by %c239_i32_70 dim 1 : vector<8x256xf32>, i32 -> vector<8x256xf32>
    %c8_71 = arith.constant 8 : index
    %c0_72 = arith.constant 0 : index
    %116 = vector.load %arg2[%c8_71, %c0_72] : memref<9x256xf32, #tpu.memory_space<vmem>>, vector<1x256xf32>
    %117 = vector.broadcast %116 : vector<1x256xf32> to vector<8x256xf32>
    %118 = arith.mulf %115, %117 : vector<8x256xf32>
    %119 = arith.truncf %118 : vector<8x256xf32> to vector<8x256xbf16>
    %c72_73 = arith.constant 72 : index
    %c0_74 = arith.constant 0 : index
    %120 = vector.load %arg8[%c72_73, %c0_74] : memref<80x256xbf16, #tpu.memory_space<vmem>>, vector<8x256xbf16>
    tpu.vector_store %arg8[%c72_73, %c0_74], %119 {strides = array<i32>} : memref<80x256xbf16, #tpu.memory_space<vmem>>, vector<8x256xbf16>,
    %c0_75 = arith.constant 0 : index
    %c0_76 = arith.constant 0 : index
    %121 = vector.load %arg4[%c0_75, %c0_76] : memref<8x80xbf16, #tpu.memory_space<vmem>>, vector<8x80xbf16>
    %c0_77 = arith.constant 0 : index
    %c0_78 = arith.constant 0 : index
    %122 = vector.load %arg8[%c0_77, %c0_78] : memref<80x256xbf16, #tpu.memory_space<vmem>>, vector<80x256xbf16>
    %cst_79 = arith.constant dense<0.000000e+00> : vector<8x256xf32>
    %123 = tpu.matmul %121, %122, %cst_79 {dimension_numbers = #tpu.dot_dimension_numbers<[1], [0], [0], [1], [0, 0, 1, 1], [], []>} : vector<8x80xbf16>, vector<80x256xbf16>, vector<8x256xf32> -> vector<8x256xf32>
    %cst_80 = arith.constant 0.000000e+00 : f32
    %124 = vector.broadcast %cst_80 : f32 to vector<8x256xf32>
    %125 = arith.cmpf ogt, %123, %124 : vector<8x256xf32>
    %126 = vector.broadcast %1 : f32 to vector<8x256xf32>
    %127 = arith.mulf %126, %123 : vector<8x256xf32>
    %128 = arith.select %125, %123, %127 : vector<8x256xi1>, vector<8x256xf32>
    %129 = arith.truncf %128 : vector<8x256xf32> to vector<8x256xbf16>
    %c8_81 = arith.constant 8 : index
    %c0_82 = arith.constant 0 : index
    %130 = vector.load %arg8[%c8_81, %c0_82] : memref<80x256xbf16, #tpu.memory_space<vmem>>, vector<8x256xbf16>
    tpu.vector_store %arg8[%c8_81, %c0_82], %129 {strides = array<i32>} : memref<80x256xbf16, #tpu.memory_space<vmem>>, vector<8x256xbf16>,
    %c0_83 = arith.constant 0 : index
    %c0_84 = arith.constant 0 : index
    %131 = vector.load %arg5[%c0_83, %c0_84] : memref<8x16xbf16, #tpu.memory_space<vmem>>, vector<8x16xbf16>
    %c0_85 = arith.constant 0 : index
    %c0_86 = arith.constant 0 : index
    %132 = vector.load %arg8[%c0_85, %c0_86] : memref<80x256xbf16, #tpu.memory_space<vmem>>, vector<16x256xbf16>
    %cst_87 = arith.constant dense<0.000000e+00> : vector<8x256xf32>
    %133 = tpu.matmul %131, %132, %cst_87 {dimension_numbers = #tpu.dot_dimension_numbers<[1], [0], [0], [1], [0, 0, 1, 1], [], []>} : vector<8x16xbf16>, vector<16x256xbf16>, vector<8x256xf32> -> vector<8x256xf32>
    %cst_88 = arith.constant 0.000000e+00 : f32
    %134 = vector.broadcast %cst_88 : f32 to vector<8x256xf32>
    %135 = arith.cmpf ogt, %133, %134 : vector<8x256xf32>
    %136 = vector.broadcast %2 : f32 to vector<8x256xf32>
    %137 = arith.mulf %136, %133 : vector<8x256xf32>
    %138 = arith.select %135, %133, %137 : vector<8x256xi1>, vector<8x256xf32>
    %139 = vector.extract_strided_slice %138 {offsets = [0, 0], sizes = [4, 256], strides = [1, 1]} : vector<8x256xf32> to vector<4x256xf32>
    %c0_89 = arith.constant 0 : index
    %c0_90 = arith.constant 0 : index
    %c0_91 = arith.constant 0 : index
    %140 = vector.load %arg7[%c0_89, %c0_90, %c0_91] : memref<1x4x256xf32, #tpu.memory_space<vmem>>, vector<1x4x256xf32>
    %141 = vector.shape_cast %140 : vector<1x4x256xf32> to vector<4x256xf32>
    %142 = vector.shape_cast %139 : vector<4x256xf32> to vector<1x4x256xf32>
    tpu.vector_store %arg7[%c0_89, %c0_90, %c0_91], %142 {strides = array<i32>} : memref<1x4x256xf32, #tpu.memory_space<vmem>>, vector<1x4x256xf32>,
    return
  }
  func.func @transform_0(%arg0: i32) -> (i32, i32, i32) {
    %c0_i32 = arith.constant 0 : i32
    %c0_i32_0 = arith.constant 0 : i32
    %c0_i32_1 = arith.constant 0 : i32
    return %arg0, %c0_i32, %c0_i32_0 : i32, i32, i32
  }
  func.func @transform_1(%arg0: i32) -> (i32, i32) {
    %c0_i32 = arith.constant 0 : i32
    %c0_i32_0 = arith.constant 0 : i32
    %c0_i32_1 = arith.constant 0 : i32
    return %c0_i32, %c0_i32_0 : i32, i32
  }
  func.func @transform_2(%arg0: i32) -> (i32, i32) {
    %c0_i32 = arith.constant 0 : i32
    %c0_i32_0 = arith.constant 0 : i32
    %c0_i32_1 = arith.constant 0 : i32
    return %c0_i32, %c0_i32_0 : i32, i32
  }
  func.func @transform_3(%arg0: i32) -> (i32, i32) {
    %c0_i32 = arith.constant 0 : i32
    %c0_i32_0 = arith.constant 0 : i32
    %c0_i32_1 = arith.constant 0 : i32
    return %c0_i32, %c0_i32_0 : i32, i32
  }
  func.func @transform_4(%arg0: i32) -> (i32, i32) {
    %c0_i32 = arith.constant 0 : i32
    %c0_i32_0 = arith.constant 0 : i32
    %c0_i32_1 = arith.constant 0 : i32
    return %c0_i32, %c0_i32_0 : i32, i32
  }
  func.func @transform_5(%arg0: i32) -> i32 {
    %c0_i32 = arith.constant 0 : i32
    %c0_i32_0 = arith.constant 0 : i32
    return %c0_i32 : i32
  }
  func.func @transform_6(%arg0: i32) -> (i32, i32, i32) {
    %c0_i32 = arith.constant 0 : i32
    %c0_i32_0 = arith.constant 0 : i32
    %c0_i32_1 = arith.constant 0 : i32
    return %arg0, %c0_i32, %c0_i32_0 : i32, i32, i32
  }
}

</mosaic_0001>

<llo_original>
// kernel: tpu_custom_call.1
$region0: #{tpu_custom_call.1}
  #allocation0 [shape = 'u32[]', space=smem, size = 0x4, offset = 0x4, fixed_abs, tag = 'smem constant byte address 0x4 - core index']
  #allocation1 [shape = 'u32[144,128]{1,0:T(1,128)}', space=vmem, size = 0x12000, scoped, tag = 'internal scratch']
  #allocation2 [shape = 'bf16[80,256]{1,0:T(16,128)(2,1)}', space=vmem, size = 0xa000, scoped, tag = 'scratch operand']
  %s0 = inlined_call_operand.hbm [shape: f32[2,8,256], index: 0, kind: input, shape index: {}]
  %s1 = inlined_call_operand.hbm [shape: f32[9,256], index: 1, kind: input, shape index: {}]
  %s2 = inlined_call_operand.vmem [shape: bf16[8,80], index: 2, kind: input, shape index: {}]
  %s3 = inlined_call_operand.vmem [shape: bf16[8,80], index: 3, kind: input, shape index: {}]
  %s4 = inlined_call_operand.vmem [shape: bf16[8,16], index: 4, kind: input, shape index: {}]
  %s5 = inlined_call_operand.vmem [shape: f32[3], index: 5, kind: input, shape index: {}]
  %s6 = inlined_call_operand.hbm [shape: f32[2,4,256], index: 6, kind: output, shape index: {}]
  %s7 = sld [smem:[#allocation0]]
  $region69: #{tpu_custom_call.1} parent=0
    _
  %s9 = ssub.s32 1, %s7
  %s10 = scalar_select 0, %s9, %s7
  $region1: #{tpu_custom_call.1} parent=0
    #allocation3 [shape = 'u8[16384]{0}', space=vmem, size = 0x4000, scoped, tag = 'input window, operand 0']
    #allocation4 [shape = 's32[2]{0}', space=sflag, size = 0x8, scoped, tag = 'scoped memory for tpu_custom_call.1']
    #allocation5 [shape = 's32[2]{0}', space=sflag, size = 0x8, scoped, tag = 'scoped memory for tpu_custom_call.1']
    #allocation6 [shape = 's32[2]{0}', space=sflag, size = 0x8, scoped, tag = 'scoped memory for tpu_custom_call.1']
    #allocation7 [shape = 'u8[16384]{0}', space=vmem, size = 0x4000, scoped, tag = 'input window, operand 1, single buffered']
    #allocation8 [shape = 's32[1]{0}', space=sflag, size = 0x4, scoped, tag = 'scoped memory for tpu_custom_call.1']
    #allocation9 [shape = 'u8[512]{0}', space=smem, size = 0x200, scoped, tag = 'input window, operand 5, single buffered']
    #allocation10 [shape = 'u8[8192]{0}', space=vmem, size = 0x2000, scoped, tag = 'output window, operand 0']
    %11 = vsyncpa [#allocation4], 0
    %s12 = scalar_lea.sflag [#allocation4], 1
    %13 = vsyncpa %s12, 0
    %14 = vsyncpa [#allocation8], 0
    %15 = vsyncpa [#allocation6], 0
    %16 = vsyncpa [#allocation5], 0
    %s17 = scalar_lea.sflag [#allocation5], 1
    %18 = vsyncpa %s17, 0
    loop: start=0, step=1, limit=4
    $region2: #{tpu_custom_call.1} parent=1 // loop_pre_header
      _
    $region3: #{tpu_custom_call.1} parent=1 // loop_header
      %s20 = sphi 0, %s24
      %p21 = scmp.ge.s32.totalorder %s20, 4
      %s30 = sphi 0, %s32
      %s33 = sphi 0, %s30
      %s34 = sphi 0, %s33
      %s50 = sphi 0, %s34
      %s54 = sphi 0, %s54
      %s56 = sphi 0, %s54
      %s57 = sphi 0, %s56
      %s71 = sphi 0, %s57
      %s75 = sphi 0, %s75
      %s77 = sphi 0, %s75
      %s78 = sphi 0, %s77
      %s92 = sphi 0, %s78
      %s96 = sphi 0, %s96
      %s98 = sphi 0, %s96
      %s99 = sphi 0, %s98
      %s113 = sphi 0, %s99
      %s117 = sphi 0, %s117
      %s119 = sphi 0, %s117
      %s120 = sphi 0, %s119
      %s134 = sphi 0, %s120
      %s138 = sphi 0, %s138
      %s140 = sphi 0, %s138
      %s141 = sphi 0, %s140
      %s155 = sphi 0, %s141
      %s161 = sphi 0, %s163
      %s164 = sphi 0, %s161
      %s165 = sphi 0, %s164
      %s181 = sphi 0, %s165
    $region4: #{tpu_custom_call.1} parent=1 // loop_header_branch
      %23 = sbr.rel (%p21) target = $region8
    $region5: #{tpu_custom_call.1} parent=1 // loop_body
      %s25 = ssub.s32 %s20, 1
      %s26 = ssub.s32 %s20, 2
      %s27 = sadd.s32 %s20, 1
      %s28 = ssub.s32 %s20, %s27
      %p29 = scmp.eq.s32.totalorder %s28, 0
      %s31 = sadd.s32 %s30, 1
      %s32 = scalar_select %p29, %s30, %s31
      %p35 = pneg %p29
      %p36 = scmp.eq.s32.totalorder %s20, 1
      %p37 = por %p35, %p36
      %p38 = scmp.ne.s32.totalorder %s30, %s33
      %p39 = scmp.eq.s32.totalorder %s20, 0
      %p40 = por %p38, %p39
      %p41 = scmp.ne.s32.totalorder %s30, %s33
      %p42 = scmp.eq.s32.totalorder %s25, 1
      %p43 = por %p41, %p42
      %p44 = scmp.ne.s32.totalorder %s33, %s34
      %p45 = scmp.eq.s32.totalorder %s25, 0
      %p46 = por %p44, %p45
      %p47 = scmp.ne.s32.totalorder %s33, %s34
      %p48 = scmp.eq.s32.totalorder %s26, 1
      %p49 = por %p47, %p48
      %p51 = scmp.ne.s32.totalorder %s34, %s50
      %p52 = scmp.eq.s32.totalorder %s26, 0
      %p53 = por %p51, %p52
      %s55 = sadd.s32 %s54, 1
      %p58 = scmp.eq.s32.totalorder %s20, 1
      %p59 = scmp.ne.s32.totalorder %s54, %s56
      %p60 = scmp.eq.s32.totalorder %s20, 0
      %p61 = por %p59, %p60
      %p62 = scmp.ne.s32.totalorder %s54, %s56
      %p63 = scmp.eq.s32.totalorder %s25, 1
      %p64 = por %p62, %p63
      %p65 = scmp.ne.s32.totalorder %s56, %s57
      %p66 = scmp.eq.s32.totalorder %s25, 0
      %p67 = por %p65, %p66
      %p68 = scmp.ne.s32.totalorder %s56, %s57
      %p69 = scmp.eq.s32.totalorder %s26, 1
      %p70 = por %p68, %p69
      %p72 = scmp.ne.s32.totalorder %s57, %s71
      %p73 = scmp.eq.s32.totalorder %s26, 0
      %p74 = por %p72, %p73
      %s76 = sadd.s32 %s75, 1
      %p79 = scmp.eq.s32.totalorder %s20, 1
      %p80 = scmp.ne.s32.totalorder %s75, %s77
      %p81 = scmp.eq.s32.totalorder %s20, 0
      %p82 = por %p80, %p81
      %p83 = scmp.ne.s32.totalorder %s75, %s77
      %p84 = scmp.eq.s32.totalorder %s25, 1
      %p85 = por %p83, %p84
      %p86 = scmp.ne.s32.totalorder %s77, %s78
      %p87 = scmp.eq.s32.totalorder %s25, 0
      %p88 = por %p86, %p87
      %p89 = scmp.ne.s32.totalorder %s77, %s78
      %p90 = scmp.eq.s32.totalorder %s26, 1
      %p91 = por %p89, %p90
      %p93 = scmp.ne.s32.totalorder %s78, %s92
      %p94 = scmp.eq.s32.totalorder %s26, 0
      %p95 = por %p93, %p94
      %s97 = sadd.s32 %s96, 1
      %p100 = scmp.eq.s32.totalorder %s20, 1
      %p101 = scmp.ne.s32.totalorder %s96, %s98
      %p102 = scmp.eq.s32.totalorder %s20, 0
      %p103 = por %p101, %p102
      %p104 = scmp.ne.s32.totalorder %s96, %s98
      %p105 = scmp.eq.s32.totalorder %s25, 1
      %p106 = por %p104, %p105
      %p107 = scmp.ne.s32.totalorder %s98, %s99
      %p108 = scmp.eq.s32.totalorder %s25, 0
      %p109 = por %p107, %p108
      %p110 = scmp.ne.s32.totalorder %s98, %s99
      %p111 = scmp.eq.s32.totalorder %s26, 1
      %p112 = por %p110, %p111
      %p114 = scmp.ne.s32.totalorder %s99, %s113
      %p115 = scmp.eq.s32.totalorder %s26, 0
      %p116 = por %p114, %p115
      %s118 = sadd.s32 %s117, 1
      %p121 = scmp.eq.s32.totalorder %s20, 1
      %p122 = scmp.ne.s32.totalorder %s117, %s119
      %p123 = scmp.eq.s32.totalorder %s20, 0
      %p124 = por %p122, %p123
      %p125 = scmp.ne.s32.totalorder %s117, %s119
      %p126 = scmp.eq.s32.totalorder %s25, 1
      %p127 = por %p125, %p126
      %p128 = scmp.ne.s32.totalorder %s119, %s120
      %p129 = scmp.eq.s32.totalorder %s25, 0
      %p130 = por %p128, %p129
      %p131 = scmp.ne.s32.totalorder %s119, %s120
      %p132 = scmp.eq.s32.totalorder %s26, 1
      %p133 = por %p131, %p132
      %p135 = scmp.ne.s32.totalorder %s120, %s134
      %p136 = scmp.eq.s32.totalorder %s26, 0
      %p137 = por %p135, %p136
      %s139 = sadd.s32 %s138, 1
      %p142 = scmp.eq.s32.totalorder %s20, 1
      %p143 = scmp.ne.s32.totalorder %s138, %s140
      %p144 = scmp.eq.s32.totalorder %s20, 0
      %p145 = por %p143, %p144
      %p146 = scmp.ne.s32.totalorder %s138, %s140
      %p147 = scmp.eq.s32.totalorder %s25, 1
      %p148 = por %p146, %p147
      %p149 = scmp.ne.s32.totalorder %s140, %s141
      %p150 = scmp.eq.s32.totalorder %s25, 0
      %p151 = por %p149, %p150
      %p152 = scmp.ne.s32.totalorder %s140, %s141
      %p153 = scmp.eq.s32.totalorder %s26, 1
      %p154 = por %p152, %p153
      %p156 = scmp.ne.s32.totalorder %s141, %s155
      %p157 = scmp.eq.s32.totalorder %s26, 0
      %p158 = por %p156, %p157
      %s159 = ssub.s32 %s20, %s27
      %p160 = scmp.eq.s32.totalorder %s159, 0
      %s162 = sadd.s32 %s161, 1
      %s163 = scalar_select %p160, %s161, %s162
      %p166 = pneg %p160
      %p167 = scmp.eq.s32.totalorder %s20, 1
      %p168 = por %p166, %p167
      %p169 = scmp.ne.s32.totalorder %s161, %s164
      %p170 = scmp.eq.s32.totalorder %s20, 0
      %p171 = por %p169, %p170
      %p172 = scmp.ne.s32.totalorder %s161, %s164
      %p173 = scmp.eq.s32.totalorder %s25, 1
      %p174 = por %p172, %p173
      %p175 = scmp.ne.s32.totalorder %s164, %s165
      %p176 = scmp.eq.s32.totalorder %s25, 0
      %p177 = por %p175, %p176
      %p178 = scmp.ne.s32.totalorder %s164, %s165
      %p179 = scmp.eq.s32.totalorder %s26, 1
      %p180 = por %p178, %p179
      %p182 = scmp.ne.s32.totalorder %s165, %s181
      %p183 = scmp.eq.s32.totalorder %s26, 0
      %p184 = por %p182, %p183
      %p185 = scmp.le.s32.totalorder 1, %s20
      %p186 = scmp.lt.s32.totalorder %s20, 3
      %p187 = pnand %p185, %p186
      %p188 = pneg %p187
      // Predicated region
      $region9: #{tpu_custom_call.1} parent=5 // pred_check
        _
      $region10: #{tpu_custom_call.1} parent=5 // pred_check_branch
        %190 = sbr.rel (%p187) target = $region12
      $region11: #{tpu_custom_call.1} parent=5 // pred_region
        %s191 = ssub.s32 %s20, 1
        // Predicated region
        $region13: #{tpu_custom_call.1} parent=11 // pred_check
          %p192 = pneg %p67
        $region14: #{tpu_custom_call.1} parent=11 // pred_check_branch
          %194 = sbr.rel (%p192) target = $region16
        $region15: #{tpu_custom_call.1} parent=11 // pred_region
          %s196 = ssub.s32 512, 512
          %197 = vsyncadd [#allocation8], %s196
          %s198 = sshll.u32 [#allocation7], 4
          %s199 = int_to_ptr.vmem [resolvable:$true] %s198
          %204 = dma.hbm_to_vmem [thread:$0]  %s1, 512, %s199, [#allocation8], 256, 256, 16
        $region16: #{tpu_custom_call.1} parent=11 // pred_fallthru
          _
        // Predicated region
        $region17: #{tpu_custom_call.1} parent=11 // pred_check
          %p205 = pneg %p88
        $region18: #{tpu_custom_call.1} parent=11 // pred_check_branch
          %207 = sbr.rel (%p205) target = $region20
        $region19: #{tpu_custom_call.1} parent=11 // pred_region
          _
        $region20: #{tpu_custom_call.1} parent=11 // pred_fallthru
          _
        // Predicated region
        $region21: #{tpu_custom_call.1} parent=11 // pred_check
          %p208 = pneg %p109
        $region22: #{tpu_custom_call.1} parent=11 // pred_check_branch
          %210 = sbr.rel (%p208) target = $region24
        $region23: #{tpu_custom_call.1} parent=11 // pred_region
          _
        $region24: #{tpu_custom_call.1} parent=11 // pred_fallthru
          _
        // Predicated region
        $region25: #{tpu_custom_call.1} parent=11 // pred_check
          %p211 = pneg %p130
        $region26: #{tpu_custom_call.1} parent=11 // pred_check_branch
          %213 = sbr.rel (%p211) target = $region28
        $region27: #{tpu_custom_call.1} parent=11 // pred_region
          _
        $region28: #{tpu_custom_call.1} parent=11 // pred_fallthru
          _
        // Predicated region
        $region29: #{tpu_custom_call.1} parent=11 // pred_check
          %p214 = pneg %p151
        $region30: #{tpu_custom_call.1} parent=11 // pred_check_branch
          %216 = sbr.rel (%p214) target = $region32
        $region31: #{tpu_custom_call.1} parent=11 // pred_region
          %s218 = ssub.s32 16, 16
          %219 = vsyncadd [#allocation6], %s218
          %s221 = sshll.u32 %s5, 4
          %s222 = int_to_ptr.vmem [resolvable:$true] %s221
          %224 = dma.vmem_to_smem %s222, 16, [#allocation9], [#allocation6]
        $region32: #{tpu_custom_call.1} parent=11 // pred_fallthru
          _
      $region12: #{tpu_custom_call.1} parent=5 // pred_fallthru
        _
      %p225 = scmp.lt.s32.totalorder %s20, 2
      // Predicated region
      $region33: #{tpu_custom_call.1} parent=5 // pred_check
        %p226 = pneg %p225
      $region34: #{tpu_custom_call.1} parent=5 // pred_check_branch
        %228 = sbr.rel (%p226) target = $region36
      $region35: #{tpu_custom_call.1} parent=5 // pred_region
        // Predicated region
        $region37: #{tpu_custom_call.1} parent=35 // pred_check
          %p229 = pneg %p40
        $region38: #{tpu_custom_call.1} parent=35 // pred_check_branch
          %231 = sbr.rel (%p229) target = $region40
        $region39: #{tpu_custom_call.1} parent=35 // pred_region
          %s232 = sand.u32 %s30, 1
          %s233 = scalar_lea.sflag [#allocation4], %s232
          %s234 = sand.u32 %s30, 1
          %s235 = smul.addr %s234, 16
          %s236 = scalar_lea.vmem [#allocation3], %s235
          %s238 = ssub.s32 256, 256
          %239 = vsyncadd %s233, %s238
          %s240 = smul.addr %s20, 2
          %s241 = smul.addr %s240, 128
          %s242 = scalar_lea.hbm %s0, %s241
          %s244 = sshll.u32 %s236, 4
          %s245 = int_to_ptr.vmem [resolvable:$true] %s244
          %247 = dma.hbm_to_vmem [thread:$0]  %s242, 256, %s245, %s233
        $region40: #{tpu_custom_call.1} parent=35 // pred_fallthru
          _
      $region36: #{tpu_custom_call.1} parent=5 // pred_fallthru
        _
      %p248 = scmp.le.s32.totalorder 1, %s20
      %p249 = scmp.lt.s32.totalorder %s20, 3
      %p250 = pnand %p248, %p249
      %p251 = pneg %p250
      // Predicated region
      $region41: #{tpu_custom_call.1} parent=5 // pred_check
        _
      $region42: #{tpu_custom_call.1} parent=5 // pred_check_branch
        %253 = sbr.rel (%p250) target = $region44
      $region43: #{tpu_custom_call.1} parent=5 // pred_region
        %s254 = ssub.s32 %s20, 1
        %s255 = sand.u32 %s33, 1
        %s256 = scalar_lea.sflag [#allocation4], %s255
        %s257 = sand.u32 %s33, 1
        %s258 = smul.addr %s257, 16
        %s259 = scalar_lea.vmem [#allocation3], %s258
        // Predicated region
        $region45: #{tpu_custom_call.1} parent=43 // pred_check
          %p260 = pneg %p46
        $region46: #{tpu_custom_call.1} parent=43 // pred_check_branch
          %262 = sbr.rel (%p260) target = $region48
        $region47: #{tpu_custom_call.1} parent=43 // pred_region
          %263 = dma.done %s256, 256
        $region48: #{tpu_custom_call.1} parent=43 // pred_fallthru
          _
        // Predicated region
        $region49: #{tpu_custom_call.1} parent=43 // pred_check
          %p264 = pneg %p67
        $region50: #{tpu_custom_call.1} parent=43 // pred_check_branch
          %266 = sbr.rel (%p264) target = $region52
        $region51: #{tpu_custom_call.1} parent=43 // pred_region
          %267 = dma.done [#allocation8], 512
        $region52: #{tpu_custom_call.1} parent=43 // pred_fallthru
          _
        // Predicated region
        $region53: #{tpu_custom_call.1} parent=43 // pred_check
          %p268 = pneg %p151
        $region54: #{tpu_custom_call.1} parent=43 // pred_check_branch
          %270 = sbr.rel (%p268) target = $region56
        $region55: #{tpu_custom_call.1} parent=43 // pred_region
          %271 = dma.done [#allocation6], 16
        $region56: #{tpu_custom_call.1} parent=43 // pred_fallthru
          _
        %272 = sfence
        %s273 = sand.u32 %s33, 1
        %s274 = scalar_lea.sflag [#allocation4], %s273
        %s275 = sand.u32 %s33, 1
        %s276 = smul.addr %s275, 16
        %s277 = scalar_lea.vmem [#allocation3], %s276
        %p278 = pneg %p46
        %p279 = pneg %p43
        %p280 = pneg %p67
        %p281 = pneg %p64
        %p282 = pneg %p88
        %p283 = pneg %p85
        %p284 = pneg %p109
        %p285 = pneg %p106
        %p286 = pneg %p130
        %p287 = pneg %p127
        %p288 = pneg %p151
        %p289 = pneg %p148
        %p290 = pneg %p177
        %p291 = pneg %p174
        %s292 = sand.u32 %s164, 1
        %s293 = scalar_lea.sflag [#allocation5], %s292
        %s294 = sand.u32 %s164, 1
        %s295 = smul.addr %s294, 8
        %s296 = scalar_lea.vmem [#allocation10], %s295
        %s298 = sld [smem:[#allocation9]]
        %s299 = sld [smem:[#allocation9 + $0x1]]
        %s300 = sld [smem:[#allocation9 + $0x2]]
        %v301 = vlaneseq
        %v302 = vshrl.u32 %v301, 7
        %vm303 = vcmp.eq.s32.totalorder %v302, 0
        %v304 = vsel %vm303, 1.0, 0.0
        %v305 = vpack.c.bf16 %v304, %v304
        %306 = vst [vmem:[#allocation2] sm:$0xf] %v305
        %307 = vst [vmem:[#allocation2 + $0x8] sm:$0xf] %v305
        %v308 = vld [vmem:[%s259] sm:$0xff]
        %v309 = vld [vmem:[%s259 + $0x8] sm:$0xff]
        %310 = vrot.lane.b32.xlu0 %v308, 17
        %v311 = vpop.permute.xlu0 %310
        %312 = vrot.lane.b32.xlu0 %v309, 17
        %v313 = vpop.permute.xlu0 %312
        %v314 = vlaneseq
        %v315 = vand.u32 %v314, 127
        %vm316 = vcmp.lt.s32.totalorder %v315, 17
        %v317 = vsel %vm316, %v311, %v313
        %v318 = vsel %vm316, %v313, %v311
        %v319 = vld [vmem:[#allocation7] ss:$8 sm:$0x3]
        %v321 = vlaneseq
        %v322 = vshrl.u32 %v321, 7
        %v323 = vsub.s32 0, %v322
        %v324 = vrot.slane %v319, %v323
        %v325 = vlaneseq
        %v326 = vshrl.u32 %v325, 7
        %v327 = vsub.s32 1, %v326
        %v328 = vrot.slane %v319, %v327
        %v331 = vmul.f32 %v318, %v324
        %v332 = vmul.f32 %v317, %v328
        %v333 = vpack.c.bf16 %v331, %v331
        %v334 = vpack.c.bf16 %v332, %v332
        %v337 = vrot.slane %v333, 4
        %v338 = vrot.slane %v334, 4
        %341 = vst [vmem:[#allocation2] sm:$0xf0] %v337
        %342 = vst [vmem:[#allocation2 + $0x8] sm:$0xf0] %v338
        %343 = vrot.lane.b32.xlu0 %v308, 16
        %v344 = vpop.permute.xlu0 %343
        %345 = vrot.lane.b32.xlu0 %v309, 16
        %v346 = vpop.permute.xlu0 %345
        %vm347 = vcmp.lt.s32.totalorder %v315, 16
        %v348 = vsel %vm347, %v344, %v346
        %v349 = vsel %vm347, %v346, %v344
        %s350 = scalar_lea.vmem [#allocation7], 1
        %v351 = vld [vmem:[%s350] ss:$8 sm:$0x3]
        %v353 = vlaneseq
        %v354 = vshrl.u32 %v353, 7
        %v355 = vsub.s32 0, %v354
        %v356 = vrot.slane %v351, %v355
        %v357 = vlaneseq
        %v358 = vshrl.u32 %v357, 7
        %v359 = vsub.s32 1, %v358
        %v360 = vrot.slane %v351, %v359
        %v363 = vmul.f32 %v349, %v356
        %v364 = vmul.f32 %v348, %v360
        %v365 = vpack.c.bf16 %v363, %v363
        %v366 = vpack.c.bf16 %v364, %v364
        %367 = vst [vmem:[#allocation2 + $0x10] sm:$0xf] %v365
        %368 = vst [vmem:[#allocation2 + $0x18] sm:$0xf] %v366
        %369 = vrot.lane.b32.xlu0 %v308, 15
        %v370 = vpop.permute.xlu0 %369
        %371 = vrot.lane.b32.xlu0 %v309, 15
        %v372 = vpop.permute.xlu0 %371
        %vm373 = vcmp.lt.s32.totalorder %v315, 15
        %v374 = vsel %vm373, %v370, %v372
        %v375 = vsel %vm373, %v372, %v370
        %s376 = scalar_lea.vmem [#allocation7], 2
        %v377 = vld [vmem:[%s376] ss:$8 sm:$0x3]
        %v379 = vlaneseq
        %v380 = vshrl.u32 %v379, 7
        %v381 = vsub.s32 0, %v380
        %v382 = vrot.slane %v377, %v381
        %v383 = vlaneseq
        %v384 = vshrl.u32 %v383, 7
        %v385 = vsub.s32 1, %v384
        %v386 = vrot.slane %v377, %v385
        %v389 = vmul.f32 %v375, %v382
        %v390 = vmul.f32 %v374, %v386
        %v391 = vpack.c.bf16 %v389, %v389
        %v392 = vpack.c.bf16 %v390, %v390
        %v395 = vrot.slane %v391, 4
        %v396 = vrot.slane %v392, 4
        %399 = vst [vmem:[#allocation2 + $0x10] sm:$0xf0] %v395
        %400 = vst [vmem:[#allocation2 + $0x18] sm:$0xf0] %v396
        %401 = vrot.lane.b32.xlu0 %v308, 1
        %v402 = vpop.permute.xlu0 %401
        %403 = vrot.lane.b32.xlu0 %v309, 1
        %v404 = vpop.permute.xlu0 %403
        %vm405 = vcmp.lt.s32.totalorder %v315, 1
        %v406 = vsel %vm405, %v402, %v404
        %v407 = vsel %vm405, %v404, %v402
        %s408 = scalar_lea.vmem [#allocation7], 3
        %v409 = vld [vmem:[%s408] ss:$8 sm:$0x3]
        %v411 = vlaneseq
        %v412 = vshrl.u32 %v411, 7
        %v413 = vsub.s32 0, %v412
        %v414 = vrot.slane %v409, %v413
        %v415 = vlaneseq
        %v416 = vshrl.u32 %v415, 7
        %v417 = vsub.s32 1, %v416
        %v418 = vrot.slane %v409, %v417
        %v421 = vmul.f32 %v407, %v414
        %v422 = vmul.f32 %v406, %v418
        %v423 = vpack.c.bf16 %v421, %v421
        %v424 = vpack.c.bf16 %v422, %v422
        %425 = vst [vmem:[#allocation2 + $0x20] sm:$0xf] %v423
        %426 = vst [vmem:[#allocation2 + $0x28] sm:$0xf] %v424
        %v427 = vpack.c.bf16 %v308, %v308
        %v428 = vpack.c.bf16 %v309, %v309
        %v431 = vrot.slane %v427, 4
        %v432 = vrot.slane %v428, 4
        %435 = vst [vmem:[#allocation2 + $0x20] sm:$0xf0] %v431
        %436 = vst [vmem:[#allocation2 + $0x28] sm:$0xf0] %v432
        %437 = vrot.lane.b32.xlu0 %v308, 127
        %v438 = vpop.permute.xlu0 %437
        %439 = vrot.lane.b32.xlu0 %v309, 127
        %v440 = vpop.permute.xlu0 %439
        %vm441 = vcmp.lt.s32.totalorder %v315, 127
        %v442 = vsel %vm441, %v438, %v440
        %v443 = vsel %vm441, %v440, %v438
        %s444 = scalar_lea.vmem [#allocation7], 5
        %v445 = vld [vmem:[%s444] ss:$8 sm:$0x3]
        %v447 = vlaneseq
        %v448 = vshrl.u32 %v447, 7
        %v449 = vsub.s32 0, %v448
        %v450 = vrot.slane %v445, %v449
        %v451 = vlaneseq
        %v452 = vshrl.u32 %v451, 7
        %v453 = vsub.s32 1, %v452
        %v454 = vrot.slane %v445, %v453
        %v457 = vmul.f32 %v442, %v450
        %v458 = vmul.f32 %v443, %v454
        %v459 = vpack.c.bf16 %v457, %v457
        %v460 = vpack.c.bf16 %v458, %v458
        %461 = vst [vmem:[#allocation2 + $0x30] sm:$0xf] %v459
        %462 = vst [vmem:[#allocation2 + $0x38] sm:$0xf] %v460
        %463 = vrot.lane.b32.xlu0 %v308, 113
        %v464 = vpop.permute.xlu0 %463
        %465 = vrot.lane.b32.xlu0 %v309, 113
        %v466 = vpop.permute.xlu0 %465
        %vm467 = vcmp.lt.s32.totalorder %v315, 113
        %v468 = vsel %vm467, %v464, %v466
        %v469 = vsel %vm467, %v466, %v464
        %s470 = scalar_lea.vmem [#allocation7], 6
        %v471 = vld [vmem:[%s470] ss:$8 sm:$0x3]
        %v473 = vlaneseq
        %v474 = vshrl.u32 %v473, 7
        %v475 = vsub.s32 0, %v474
        %v476 = vrot.slane %v471, %v475
        %v477 = vlaneseq
        %v478 = vshrl.u32 %v477, 7
        %v479 = vsub.s32 1, %v478
        %v480 = vrot.slane %v471, %v479
        %v483 = vmul.f32 %v468, %v476
        %v484 = vmul.f32 %v469, %v480
        %v485 = vpack.c.bf16 %v483, %v483
        %v486 = vpack.c.bf16 %v484, %v484
        %v489 = vrot.slane %v485, 4
        %v490 = vrot.slane %v486, 4
        %493 = vst [vmem:[#allocation2 + $0x30] sm:$0xf0] %v489
        %494 = vst [vmem:[#allocation2 + $0x38] sm:$0xf0] %v490
        %495 = vrot.lane.b32.xlu0 %v308, 112
        %v496 = vpop.permute.xlu0 %495
        %497 = vrot.lane.b32.xlu0 %v309, 112
        %v498 = vpop.permute.xlu0 %497
        %vm499 = vcmp.lt.s32.totalorder %v315, 112
        %v500 = vsel %vm499, %v496, %v498
        %v501 = vsel %vm499, %v498, %v496
        %s502 = scalar_lea.vmem [#allocation7], 7
        %v503 = vld [vmem:[%s502] ss:$8 sm:$0x3]
        %v505 = vlaneseq
        %v506 = vshrl.u32 %v505, 7
        %v507 = vsub.s32 0, %v506
        %v508 = vrot.slane %v503, %v507
        %v509 = vlaneseq
        %v510 = vshrl.u32 %v509, 7
        %v511 = vsub.s32 1, %v510
        %v512 = vrot.slane %v503, %v511
        %v515 = vmul.f32 %v500, %v508
        %v516 = vmul.f32 %v501, %v512
        %v517 = vpack.c.bf16 %v515, %v515
        %v518 = vpack.c.bf16 %v516, %v516
        %519 = vst [vmem:[#allocation2 + $0x40] sm:$0xf] %v517
        %520 = vst [vmem:[#allocation2 + $0x48] sm:$0xf] %v518
        %521 = vrot.lane.b32.xlu0 %v308, 111
        %v522 = vpop.permute.xlu0 %521
        %523 = vrot.lane.b32.xlu0 %v309, 111
        %v524 = vpop.permute.xlu0 %523
        %vm525 = vcmp.lt.s32.totalorder %v315, 111
        %v526 = vsel %vm525, %v522, %v524
        %v527 = vsel %vm525, %v524, %v522
        %s528 = scalar_lea.vmem [#allocation7], 16
        %v529 = vld [vmem:[%s528] ss:$8 sm:$0x3]
        %v531 = vlaneseq
        %v532 = vshrl.u32 %v531, 7
        %v533 = vsub.s32 0, %v532
        %v534 = vrot.slane %v529, %v533
        %v535 = vlaneseq
        %v536 = vshrl.u32 %v535, 7
        %v537 = vsub.s32 1, %v536
        %v538 = vrot.slane %v529, %v537
        %v541 = vmul.f32 %v526, %v534
        %v542 = vmul.f32 %v527, %v538
        %v543 = vpack.c.bf16 %v541, %v541
        %v544 = vpack.c.bf16 %v542, %v542
        %v547 = vrot.slane %v543, 4
        %v548 = vrot.slane %v544, 4
        %551 = vst [vmem:[#allocation2 + $0x40] sm:$0xf0] %v547
        %552 = vst [vmem:[#allocation2 + $0x48] sm:$0xf0] %v548
        %v553 = vld [vmem:[%s2] sm:$0xf]
        %v554 = vld [vmem:[#allocation2] sm:$0xff]
        %v555 = vld [vmem:[#allocation2 + $0x8] sm:$0xff]
        %v556 = vld [vmem:[#allocation2 + $0x10] sm:$0xff]
        %v557 = vld [vmem:[#allocation2 + $0x18] sm:$0xff]
        %v558 = vld [vmem:[#allocation2 + $0x20] sm:$0xff]
        %v559 = vld [vmem:[#allocation2 + $0x28] sm:$0xff]
        %v560 = vld [vmem:[#allocation2 + $0x30] sm:$0xff]
        %v561 = vld [vmem:[#allocation2 + $0x38] sm:$0xff]
        %v562 = vld [vmem:[#allocation2 + $0x40] sm:$0xff]
        %v563 = vld [vmem:[#allocation2 + $0x48] sm:$0xff]
        %vm564 = vcmask 654336
        %v566 = vsel %vm564, %v553, 0
        %568 = vmatprep.subr.bf16.mxu0 %v555
        %569 = vmatpush1.bf16.msra.mxu0 %v554
        %570 = vmatprep.subr.bf16.mxu0 %v557
        %571 = vmatpush1.bf16.msra.mxu0 %v556
        %572 = vmatprep.subr.bf16.mxu0 %v559
        %573 = vmatpush1.bf16.msra.mxu0 %v558
        %574 = vmatprep.subr.bf16.mxu0 %v561
        %575 = vmatpush1.bf16.msra.mxu0 %v560
        %576 = vmatprep.subr.bf16.mxu0 %v563
        %577 = vmatpush1.bf16.msra.mxu0 %v562
        %578 = vmatprep.subr.bf16.mxu0 0
        %579 = vmatpush1.bf16.msra.mxu0 0
        %580 = vmatprep.subr.bf16.mxu0 0
        %581 = vmatpush1.bf16.msra.mxu0 0
        %582 = vmatprep.subr.bf16.mxu0 0
        %583 = vmatpush1.bf16.msra.mxu0 0
        %584 = vmatprep.subr.bf16.mxu0 0
        %585 = vmatpush1.bf16.msra.mxu0 0
        %586 = vmatprep.subr.bf16.mxu0 0
        %587 = vmatpush1.bf16.msra.mxu0 0
        %588 = vmatprep.subr.bf16.mxu0 0
        %589 = vmatpush1.bf16.msra.mxu0 0
        %590 = vmatprep.subr.bf16.mxu0 0
        %591 = vmatpush1.bf16.msra.mxu0 0
        %592 = vmatprep.subr.bf16.mxu0 0
        %593 = vmatpush1.bf16.msra.mxu0 0
        %594 = vmatprep.subr.bf16.mxu0 0
        %595 = vmatpush1.bf16.msra.mxu0 0
        %596 = vmatprep.subr.bf16.mxu0 0
        %597 = vmatpush1.bf16.msra.mxu0 0
        %598 = vmatprep.subr.bf16.mxu0 0
        %599 = vmatpush1.bf16.msra.mxu0 0
        %600 = vmatprep.mubr.bf16.mxu0 0
        %601 = vmatmul.mubr.bf16.gmra.mrb[0].mxu0 %v566
        %v602 = vpop.f32.mrb[0].mxu0
        %v603 = vadd.f32 0.0, %v602
        %v604 = vpop.f32.mrb[0].mxu0
        %v605 = vadd.f32 0.0, %v604
        %v606 = vpop.f32.mrb[0].mxu0
        %v607 = vpop.f32.mrb[0].mxu0
        %608 = vdwg.mxu0
        %vm609 = vcmp.gt.f32.partialorder %v603, 0.0
        %vm610 = vcmp.gt.f32.partialorder %v605, 0.0
        %v611 = vstv %s298
        %v612 = vmul.f32 %v611, %v603
        %v613 = vmul.f32 %v611, %v605
        %v614 = vsel %vm609, %v603, %v612
        %v615 = vsel %vm610, %v605, %v613
        %616 = vrot.lane.b32.xlu0 %v614, 17
        %v617 = vpop.permute.xlu0 %616
        %618 = vrot.lane.b32.xlu0 %v615, 17
        %v619 = vpop.permute.xlu0 %618
        %v620 = vsel %vm316, %v617, %v619
        %v621 = vsel %vm316, %v619, %v617
        %v622 = vld [vmem:[#allocation7] ss:$8 sm:$0x3]
        %v624 = vlaneseq
        %v625 = vshrl.u32 %v624, 7
        %v626 = vsub.s32 0, %v625
        %v627 = vrot.slane %v622, %v626
        %v628 = vlaneseq
        %v629 = vshrl.u32 %v628, 7
        %v630 = vsub.s32 1, %v629
        %v631 = vrot.slane %v622, %v630
        %v634 = vmul.f32 %v621, %v627
        %v635 = vmul.f32 %v620, %v631
        %v636 = vpack.c.bf16 %v634, %v634
        %v637 = vpack.c.bf16 %v635, %v635
        %v640 = vrot.slane %v636, 4
        %v641 = vrot.slane %v637, 4
        %644 = vst [vmem:[#allocation2] sm:$0xf0] %v640
        %645 = vst [vmem:[#allocation2 + $0x8] sm:$0xf0] %v641
        %646 = vrot.lane.b32.xlu0 %v614, 16
        %v647 = vpop.permute.xlu0 %646
        %648 = vrot.lane.b32.xlu0 %v615, 16
        %v649 = vpop.permute.xlu0 %648
        %v650 = vsel %vm347, %v647, %v649
        %v651 = vsel %vm347, %v649, %v647
        %v652 = vld [vmem:[%s350] ss:$8 sm:$0x3]
        %v654 = vlaneseq
        %v655 = vshrl.u32 %v654, 7
        %v656 = vsub.s32 0, %v655
        %v657 = vrot.slane %v652, %v656
        %v658 = vlaneseq
        %v659 = vshrl.u32 %v658, 7
        %v660 = vsub.s32 1, %v659
        %v661 = vrot.slane %v652, %v660
        %v664 = vmul.f32 %v651, %v657
        %v665 = vmul.f32 %v650, %v661
        %v666 = vpack.c.bf16 %v664, %v664
        %v667 = vpack.c.bf16 %v665, %v665
        %668 = vst [vmem:[#allocation2 + $0x10] sm:$0xf] %v666
        %669 = vst [vmem:[#allocation2 + $0x18] sm:$0xf] %v667
        %670 = vrot.lane.b32.xlu0 %v614, 15
        %v671 = vpop.permute.xlu0 %670
        %672 = vrot.lane.b32.xlu0 %v615, 15
        %v673 = vpop.permute.xlu0 %672
        %v674 = vsel %vm373, %v671, %v673
        %v675 = vsel %vm373, %v673, %v671
        %v676 = vld [vmem:[%s376] ss:$8 sm:$0x3]
        %v678 = vlaneseq
        %v679 = vshrl.u32 %v678, 7
        %v680 = vsub.s32 0, %v679
        %v681 = vrot.slane %v676, %v680
        %v682 = vlaneseq
        %v683 = vshrl.u32 %v682, 7
        %v684 = vsub.s32 1, %v683
        %v685 = vrot.slane %v676, %v684
        %v688 = vmul.f32 %v675, %v681
        %v689 = vmul.f32 %v674, %v685
        %v690 = vpack.c.bf16 %v688, %v688
        %v691 = vpack.c.bf16 %v689, %v689
        %v694 = vrot.slane %v690, 4
        %v695 = vrot.slane %v691, 4
        %698 = vst [vmem:[#allocation2 + $0x10] sm:$0xf0] %v694
        %699 = vst [vmem:[#allocation2 + $0x18] sm:$0xf0] %v695
        %700 = vrot.lane.b32.xlu0 %v614, 1
        %v701 = vpop.permute.xlu0 %700
        %702 = vrot.lane.b32.xlu0 %v615, 1
        %v703 = vpop.permute.xlu0 %702
        %v704 = vsel %vm405, %v701, %v703
        %v705 = vsel %vm405, %v703, %v701
        %v706 = vld [vmem:[%s408] ss:$8 sm:$0x3]
        %v708 = vlaneseq
        %v709 = vshrl.u32 %v708, 7
        %v710 = vsub.s32 0, %v709
        %v711 = vrot.slane %v706, %v710
        %v712 = vlaneseq
        %v713 = vshrl.u32 %v712, 7
        %v714 = vsub.s32 1, %v713
        %v715 = vrot.slane %v706, %v714
        %v718 = vmul.f32 %v705, %v711
        %v719 = vmul.f32 %v704, %v715
        %v720 = vpack.c.bf16 %v718, %v718
        %v721 = vpack.c.bf16 %v719, %v719
        %722 = vst [vmem:[#allocation2 + $0x20] sm:$0xf] %v720
        %723 = vst [vmem:[#allocation2 + $0x28] sm:$0xf] %v721
        %v724 = vpack.c.bf16 %v614, %v614
        %v725 = vpack.c.bf16 %v615, %v615
        %v728 = vrot.slane %v724, 4
        %v729 = vrot.slane %v725, 4
        %732 = vst [vmem:[#allocation2 + $0x20] sm:$0xf0] %v728
        %733 = vst [vmem:[#allocation2 + $0x28] sm:$0xf0] %v729
        %734 = vrot.lane.b32.xlu0 %v614, 127
        %v735 = vpop.permute.xlu0 %734
        %736 = vrot.lane.b32.xlu0 %v615, 127
        %v737 = vpop.permute.xlu0 %736
        %v738 = vsel %vm441, %v735, %v737
        %v739 = vsel %vm441, %v737, %v735
        %v740 = vld [vmem:[%s444] ss:$8 sm:$0x3]
        %v742 = vlaneseq
        %v743 = vshrl.u32 %v742, 7
        %v744 = vsub.s32 0, %v743
        %v745 = vrot.slane %v740, %v744
        %v746 = vlaneseq
        %v747 = vshrl.u32 %v746, 7
        %v748 = vsub.s32 1, %v747
        %v749 = vrot.slane %v740, %v748
        %v752 = vmul.f32 %v738, %v745
        %v753 = vmul.f32 %v739, %v749
        %v754 = vpack.c.bf16 %v752, %v752
        %v755 = vpack.c.bf16 %v753, %v753
        %756 = vst [vmem:[#allocation2 + $0x30] sm:$0xf] %v754
        %757 = vst [vmem:[#allocation2 + $0x38] sm:$0xf] %v755
        %758 = vrot.lane.b32.xlu0 %v614, 113
        %v759 = vpop.permute.xlu0 %758
        %760 = vrot.lane.b32.xlu0 %v615, 113
        %v761 = vpop.permute.xlu0 %760
        %v762 = vsel %vm467, %v759, %v761
        %v763 = vsel %vm467, %v761, %v759
        %v764 = vld [vmem:[%s470] ss:$8 sm:$0x3]
        %v766 = vlaneseq
        %v767 = vshrl.u32 %v766, 7
        %v768 = vsub.s32 0, %v767
        %v769 = vrot.slane %v764, %v768
        %v770 = vlaneseq
        %v771 = vshrl.u32 %v770, 7
        %v772 = vsub.s32 1, %v771
        %v773 = vrot.slane %v764, %v772
        %v776 = vmul.f32 %v762, %v769
        %v777 = vmul.f32 %v763, %v773
        %v778 = vpack.c.bf16 %v776, %v776
        %v779 = vpack.c.bf16 %v777, %v777
        %v782 = vrot.slane %v778, 4
        %v783 = vrot.slane %v779, 4
        %786 = vst [vmem:[#allocation2 + $0x30] sm:$0xf0] %v782
        %787 = vst [vmem:[#allocation2 + $0x38] sm:$0xf0] %v783
        %788 = vrot.lane.b32.xlu0 %v614, 112
        %v789 = vpop.permute.xlu0 %788
        %790 = vrot.lane.b32.xlu0 %v615, 112
        %v791 = vpop.permute.xlu0 %790
        %v792 = vsel %vm499, %v789, %v791
        %v793 = vsel %vm499, %v791, %v789
        %v794 = vld [vmem:[%s502] ss:$8 sm:$0x3]
        %v796 = vlaneseq
        %v797 = vshrl.u32 %v796, 7
        %v798 = vsub.s32 0, %v797
        %v799 = vrot.slane %v794, %v798
        %v800 = vlaneseq
        %v801 = vshrl.u32 %v800, 7
        %v802 = vsub.s32 1, %v801
        %v803 = vrot.slane %v794, %v802
        %v806 = vmul.f32 %v792, %v799
        %v807 = vmul.f32 %v793, %v803
        %v808 = vpack.c.bf16 %v806, %v806
        %v809 = vpack.c.bf16 %v807, %v807
        %810 = vst [vmem:[#allocation2 + $0x40] sm:$0xf] %v808
        %811 = vst [vmem:[#allocation2 + $0x48] sm:$0xf] %v809
        %812 = vrot.lane.b32.xlu0 %v614, 111
        %v813 = vpop.permute.xlu0 %812
        %814 = vrot.lane.b32.xlu0 %v615, 111
        %v815 = vpop.permute.xlu0 %814
        %v816 = vsel %vm525, %v813, %v815
        %v817 = vsel %vm525, %v815, %v813
        %v818 = vld [vmem:[%s528] ss:$8 sm:$0x3]
        %v820 = vlaneseq
        %v821 = vshrl.u32 %v820, 7
        %v822 = vsub.s32 0, %v821
        %v823 = vrot.slane %v818, %v822
        %v824 = vlaneseq
        %v825 = vshrl.u32 %v824, 7
        %v826 = vsub.s32 1, %v825
        %v827 = vrot.slane %v818, %v826
        %v830 = vmul.f32 %v816, %v823
        %v831 = vmul.f32 %v817, %v827
        %v832 = vpack.c.bf16 %v830, %v830
        %v833 = vpack.c.bf16 %v831, %v831
        %v836 = vrot.slane %v832, 4
        %v837 = vrot.slane %v833, 4
        %840 = vst [vmem:[#allocation2 + $0x40] sm:$0xf0] %v836
        %841 = vst [vmem:[#allocation2 + $0x48] sm:$0xf0] %v837
        %v842 = vld [vmem:[%s3] sm:$0xf]
        %v843 = vld [vmem:[#allocation2] sm:$0xff]
        %v844 = vld [vmem:[#allocation2 + $0x8] sm:$0xff]
        %v845 = vld [vmem:[#allocation2 + $0x10] sm:$0xff]
        %v846 = vld [vmem:[#allocation2 + $0x18] sm:$0xff]
        %v847 = vld [vmem:[#allocation2 + $0x20] sm:$0xff]
        %v848 = vld [vmem:[#allocation2 + $0x28] sm:$0xff]
        %v849 = vld [vmem:[#allocation2 + $0x30] sm:$0xff]
        %v850 = vld [vmem:[#allocation2 + $0x38] sm:$0xff]
        %v851 = vld [vmem:[#allocation2 + $0x40] sm:$0xff]
        %v852 = vld [vmem:[#allocation2 + $0x48] sm:$0xff]
        %v854 = vsel %vm564, %v842, 0
        %856 = vmatprep.subr.bf16.mxu0 %v844
        %857 = vmatpush1.bf16.msra.mxu0 %v843
        %858 = vmatprep.subr.bf16.mxu0 %v846
        %859 = vmatpush1.bf16.msra.mxu0 %v845
        %860 = vmatprep.subr.bf16.mxu0 %v848
        %861 = vmatpush1.bf16.msra.mxu0 %v847
        %862 = vmatprep.subr.bf16.mxu0 %v850
        %863 = vmatpush1.bf16.msra.mxu0 %v849
        %864 = vmatprep.subr.bf16.mxu0 %v852
        %865 = vmatpush1.bf16.msra.mxu0 %v851
        %866 = vmatprep.subr.bf16.mxu0 0
        %867 = vmatpush1.bf16.msra.mxu0 0
        %868 = vmatprep.subr.bf16.mxu0 0
        %869 = vmatpush1.bf16.msra.mxu0 0
        %870 = vmatprep.subr.bf16.mxu0 0
        %871 = vmatpush1.bf16.msra.mxu0 0
        %872 = vmatprep.subr.bf16.mxu0 0
        %873 = vmatpush1.bf16.msra.mxu0 0
        %874 = vmatprep.subr.bf16.mxu0 0
        %875 = vmatpush1.bf16.msra.mxu0 0
        %876 = vmatprep.subr.bf16.mxu0 0
        %877 = vmatpush1.bf16.msra.mxu0 0
        %878 = vmatprep.subr.bf16.mxu0 0
        %879 = vmatpush1.bf16.msra.mxu0 0
        %880 = vmatprep.subr.bf16.mxu0 0
        %881 = vmatpush1.bf16.msra.mxu0 0
        %882 = vmatprep.subr.bf16.mxu0 0
        %883 = vmatpush1.bf16.msra.mxu0 0
        %884 = vmatprep.subr.bf16.mxu0 0
        %885 = vmatpush1.bf16.msra.mxu0 0
        %886 = vmatprep.subr.bf16.mxu0 0
        %887 = vmatpush1.bf16.msra.mxu0 0
        %888 = vmatprep.mubr.bf16.mxu0 0
        %889 = vmatmul.mubr.bf16.gmra.mrb[0].mxu0 %v854
        %v890 = vpop.f32.mrb[0].mxu0
        %v891 = vadd.f32 0.0, %v890
        %v892 = vpop.f32.mrb[0].mxu0
        %v893 = vadd.f32 0.0, %v892
        %v894 = vpop.f32.mrb[0].mxu0
        %v895 = vpop.f32.mrb[0].mxu0
        %896 = vdwg.mxu0
        %vm897 = vcmp.gt.f32.partialorder %v891, 0.0
        %vm898 = vcmp.gt.f32.partialorder %v893, 0.0
        %v899 = vstv %s299
        %v900 = vmul.f32 %v899, %v891
        %v901 = vmul.f32 %v899, %v893
        %v902 = vsel %vm897, %v891, %v900
        %v903 = vsel %vm898, %v893, %v901
        %v904 = vpack.c.bf16 %v902, %v902
        %v905 = vpack.c.bf16 %v903, %v903
        %v908 = vrot.slane %v904, 4
        %v909 = vrot.slane %v905, 4
        %912 = vst [vmem:[#allocation2] sm:$0xf0] %v908
        %913 = vst [vmem:[#allocation2 + $0x8] sm:$0xf0] %v909
        %v914 = vld [vmem:[%s4] sm:$0xf]
        %v915 = vld [vmem:[#allocation2] sm:$0xff]
        %v916 = vld [vmem:[#allocation2 + $0x8] sm:$0xff]
        %vm917 = vcmask 130048
        %v919 = vsel %vm917, %v914, 0
        %921 = vmatprep.subr.bf16.mxu0 %v916
        %922 = vmatpush1.bf16.msra.mxu0 %v915
        %923 = vmatprep.subr.bf16.mxu0 0
        %924 = vmatpush1.bf16.msra.mxu0 0
        %925 = vmatprep.subr.bf16.mxu0 0
        %926 = vmatpush1.bf16.msra.mxu0 0
        %927 = vmatprep.subr.bf16.mxu0 0
        %928 = vmatpush1.bf16.msra.mxu0 0
        %929 = vmatprep.subr.bf16.mxu0 0
        %930 = vmatpush1.bf16.msra.mxu0 0
        %931 = vmatprep.subr.bf16.mxu0 0
        %932 = vmatpush1.bf16.msra.mxu0 0
        %933 = vmatprep.subr.bf16.mxu0 0
        %934 = vmatpush1.bf16.msra.mxu0 0
        %935 = vmatprep.subr.bf16.mxu0 0
        %936 = vmatpush1.bf16.msra.mxu0 0
        %937 = vmatprep.subr.bf16.mxu0 0
        %938 = vmatpush1.bf16.msra.mxu0 0
        %939 = vmatprep.subr.bf16.mxu0 0
        %940 = vmatpush1.bf16.msra.mxu0 0
        %941 = vmatprep.subr.bf16.mxu0 0
        %942 = vmatpush1.bf16.msra.mxu0 0
        %943 = vmatprep.subr.bf16.mxu0 0
        %944 = vmatpush1.bf16.msra.mxu0 0
        %945 = vmatprep.subr.bf16.mxu0 0
        %946 = vmatpush1.bf16.msra.mxu0 0
        %947 = vmatprep.subr.bf16.mxu0 0
        %948 = vmatpush1.bf16.msra.mxu0 0
        %949 = vmatprep.subr.bf16.mxu0 0
        %950 = vmatpush1.bf16.msra.mxu0 0
        %951 = vmatprep.subr.bf16.mxu0 0
        %952 = vmatpush1.bf16.msra.mxu0 0
        %953 = vmatprep.mubr.bf16.mxu0 0
        %954 = vmatmul.mubr.bf16.gmra.mrb[0].mxu0 %v919
        %v955 = vpop.f32.mrb[0].mxu0
        %v956 = vadd.f32 0.0, %v955
        %v957 = vpop.f32.mrb[0].mxu0
        %v958 = vadd.f32 0.0, %v957
        %v959 = vpop.f32.mrb[0].mxu0
        %v960 = vpop.f32.mrb[0].mxu0
        %961 = vdwg.mxu0
        %vm962 = vcmp.gt.f32.partialorder %v956, 0.0
        %vm963 = vcmp.gt.f32.partialorder %v958, 0.0
        %v964 = vstv %s300
        %v965 = vmul.f32 %v964, %v956
        %v966 = vmul.f32 %v964, %v958
        %v967 = vsel %vm962, %v956, %v965
        %v968 = vsel %vm963, %v958, %v966
        %v971 = vcombine.low %v967, %v968
        %973 = vst [vmem:[%s296] sm:$0xff] %v971
        %s974 = sand.u32 %s164, 1
        %s975 = scalar_lea.sflag [#allocation5], %s974
        %s976 = sand.u32 %s164, 1
        %s977 = smul.addr %s976, 8
        %s978 = scalar_lea.vmem [#allocation10], %s977
        // Predicated region
        $region57: #{tpu_custom_call.1} parent=43 // pred_check
          %p979 = pneg %p174
        $region58: #{tpu_custom_call.1} parent=43 // pred_check_branch
          %981 = sbr.rel (%p979) target = $region60
        $region59: #{tpu_custom_call.1} parent=43 // pred_region
          %s983 = ssub.s32 128, 128
          %984 = vsyncadd %s975, %s983
          %s985 = smul.addr %s25, 2
          %s986 = smul.addr %s985, 64
          %s987 = scalar_lea.hbm %s6, %s986
          %s989 = sshll.u32 %s978, 4
          %s990 = int_to_ptr.vmem [resolvable:$true] %s989
          %992 = dma.vmem_to_hbm [thread:$0]  %s990, 128, %s987, %s975
        $region60: #{tpu_custom_call.1} parent=43 // pred_fallthru
          _
      $region44: #{tpu_custom_call.1} parent=5 // pred_fallthru
        _
      %p993 = scmp.le.s32.totalorder 2, %s20
      // Predicated region
      $region61: #{tpu_custom_call.1} parent=5 // pred_check
        %p994 = pneg %p993
      $region62: #{tpu_custom_call.1} parent=5 // pred_check_branch
        %996 = sbr.rel (%p994) target = $region64
      $region63: #{tpu_custom_call.1} parent=5 // pred_region
        %s997 = ssub.s32 %s20, 2
        // Predicated region
        $region65: #{tpu_custom_call.1} parent=63 // pred_check
          %p998 = pneg %p180
        $region66: #{tpu_custom_call.1} parent=63 // pred_check_branch
          %1000 = sbr.rel (%p998) target = $region68
        $region67: #{tpu_custom_call.1} parent=63 // pred_region
          %s1001 = sand.u32 %s165, 1
          %s1002 = scalar_lea.sflag [#allocation5], %s1001
          %s1003 = sand.u32 %s165, 1
          %s1004 = smul.addr %s1003, 8
          %s1005 = scalar_lea.vmem [#allocation10], %s1004
          %1006 = dma.done %s1002, 128
        $region68: #{tpu_custom_call.1} parent=63 // pred_fallthru
          _
      $region64: #{tpu_custom_call.1} parent=5 // pred_fallthru
        _
    $region6: #{tpu_custom_call.1} parent=1 // loop_footer
      %s24 = sadd.s32 1, %s20
    $region7: #{tpu_custom_call.1} parent=1 // loop_footer_branch
      %19 = sbr.rel target = $region3
    $region8: #{tpu_custom_call.1} parent=1 // loop_exit
      _
    %1007 = vsyncpa [#allocation4], 1
    %s1008 = scalar_lea.sflag [#allocation4], 1
    %1009 = vsyncpa %s1008, 1
    %1010 = vsyncpa [#allocation8], 1
    %1011 = vsyncpa [#allocation5], 1
    %s1012 = scalar_lea.sflag [#allocation5], 1
    %1013 = vsyncpa %s1012, 1
    %1014 = vsyncpa [#allocation6], 1
    %s1015 = scalar_lea.sflag [#allocation6], 1
    %1016 = vsyncpa %s1015, 1

</llo_original>
